<compile_context>
chip_gen: v7x
topology: tpu7x:2x2x1
jax: 0.10.0
libtpu: 0.0.40
codegen_flags: <defaults>
</compile_context>

<pallas_src>
import functools

import jax
import jax.numpy as jnp
import numpy as np
from jax import lax
from jax.experimental import pallas as pl
from jax.experimental.pallas import tpu as pltpu

_CHANNELS = [(2, 8), (8, 4), (4, 2), (2, 1)]   # (Cin, Cout) of the 4 convs


def _round_up(x, m):
    return (x + m - 1) // m * m


@functools.lru_cache(maxsize=None)
def _roll_sign():
    """+1 if pltpu.roll follows jnp.roll semantics (out[j] = in[j - shift]), else -1.

    One-off probe on the default backend so the conv tap orientation is correct
    regardless of the roll-direction convention of the installed jax/Mosaic.
    (Probe and real call share the same backend in this self-contained script.)"""
    def k(x_ref, o_ref):
        o_ref[...] = pltpu.roll(x_ref[...], 1, 1)
    x = lax.broadcasted_iota(jnp.float32, (8, 128), 1)
    y = pl.pallas_call(k, out_shape=jax.ShapeDtypeStruct((8, 128), jnp.float32))(x)
    return 1 if float(y[0, 1]) == 0.0 else -1


def _occl_kernel(x_ref, w1, b1, w2, b2, w3, b3, w4, b4, out_ref, act_ref,
                 *, H, W, Hs, Wp, NG, cs, LP, need_cmask, sgn):
    """One grid step = NG lane groups; each group packs LP samples along lanes."""
    need_rmask = (Hs == H)            # no spare zero row in the group -> mask roll wrap

    def jroll(x, shift, axis):
        # roll with jnp.roll semantics; shift is a static +-1.
        return pltpu.roll(x, (sgn * shift) % x.shape[axis], axis)

    # Hoisted masks (each one (Hs, Wp) plane, built once per kernel instance).
    row = lax.broadcasted_iota(jnp.int32, (Hs, Wp), 0)
    col = lax.broadcasted_iota(jnp.int32, (Hs, Wp), 1)
    col_ok = col < W                                     # sample 0
    for p in range(1, LP):                               # samples packed along lanes
        col_ok = col_ok | ((col >= p * cs) & (col < p * cs + W))
    valid = ((row < H) & col_ok).astype(jnp.float32)
    rm_dn = (row >= 1).astype(jnp.float32) if need_rmask else None
    rm_up = (row < Hs - 1).astype(jnp.float32) if need_rmask else None
    cm_l = (col >= 1).astype(jnp.float32) if need_cmask else None
    cm_r = (col < Wp - 1).astype(jnp.float32) if need_cmask else None

    # Per-cout accumulators live in vregs; chunk cout if the group plane is large.
    vpp = max(1, (Hs * Wp) // 1024)                      # f32 vregs per (Hs, Wp) plane
    max_acc = max(1, 24 // vpp)

    def conv(load, cin, cout, w_ref, b_ref, relu, mask_out, store):
        # out[co,i,j] = b[co] + sum_{dh,dw,ci} w[(dh*3+dw)*cin*cout + ci*cout + co]
        #                                       * in[ci, i+dh-1, j+dw-1]   (zero padded)
        for co0 in range(0, cout, max_acc):
            cos = list(range(co0, min(cout, co0 + max_acc)))
            accs = [jnp.zeros((Hs, Wp), jnp.float32) for _ in cos]
            for ci in range(cin):                        # static unroll
                x = load(ci)                             # (Hs, Wp), zero-halo invariant
                x_dn = jroll(x, 1, 0)                    # -> in[i-1, j]   (dh = 0)
                x_up = jroll(x, -1, 0)                   # -> in[i+1, j]   (dh = 2)
                if need_rmask:                           # kill sublane wrap when Hs == H
                    x_dn = x_dn * rm_dn
                    x_up = x_up * rm_up
                xh = (x_dn, x, x_up)
                for dh in range(3):
                    for dw in range(3):
                        t = xh[dh] if dw == 1 else jroll(xh[dh], 1 - dw, 1)
                        if need_cmask and dw != 1:       # kill lane wrap (W % 128 == 0)
                            t = t * (cm_l if dw == 0 else cm_r)
                        base = (dh * 3 + dw) * cin * cout + ci * cout
                        for k, co in enumerate(cos):
                            accs[k] = accs[k] + t * w_ref[base + co]   # SMEM scalar weight
            for k, co in enumerate(cos):
                a = accs[k] + b_ref[co]
                if relu:
                    a = jnp.maximum(a, 0.0)
                if mask_out:
                    a = a * valid                        # keep separators/halo exactly zero
                store(co, a)

    for g in range(NG):                                  # static unroll over groups in step
        r0 = g * Hs

        def ld_x(ci, r0=r0):
            return x_ref[ci, r0:r0 + Hs, :]

        def ld_act(off):
            return lambda ci, off=off: act_ref[off + ci]

        def st_act(off):
            def _st(co, v, off=off):
                act_ref[off + co] = v
            return _st

        def st_out(co, z, r0=r0):
            out_ref[r0:r0 + Hs, :] = 1.0 / (1.0 + jnp.exp(-z))   # sigmoid (exp on EUP)

        # act_ref channel map: L1 -> [0,8), L2 -> [8,12), L3 -> [0,2); input and
        # output regions of consecutive layers never alias, so reads precede writes.
        conv(ld_x,      2, 8, w1, b1, relu=True,  mask_out=True,  store=st_act(0))
        conv(ld_act(0), 8, 4, w2, b2, relu=True,  mask_out=True,  store=st_act(8))
        conv(ld_act(8), 4, 2, w3, b3, relu=True,  mask_out=True,  store=st_act(0))
        conv(ld_act(0), 2, 1, w4, b4, relu=False, mask_out=False, store=st_out)
    # TODO(synk): training branch (gt is not None -> BCEWithLogitsLoss) not implemented.
    # TODO(synk): very large H or W (group plane >> vreg budget) would need intra-group
    # spatial sub-tiling; typical ROI mask sizes (<= 56) fit comfortably.


def occlusion_refinement_forward(amodal, oe, params):
    """amodal, oe: (N, 1, H, W) float32 (PyTorch NCHW). Returns sigmoid map (N, 1, H, W)."""
    N, _, H, W = amodal.shape

    # --- layout: lane-pack samples, stack lane groups along sublanes ------------
    if W + 1 <= 128:
        cs = W + 1                        # per-sample lane stride incl. 1 zero separator
        LP = 128 // cs                    # samples per 128-lane row group
        Wp = 128
        need_cmask = False                # last lane is always a zero separator / pad
    else:
        cs, LP = W, 1
        Wp = _round_up(W, 128)
        need_cmask = (Wp == W)            # no spare zero lane -> mask the roll wrap
    Hs = _round_up(H, 8)                  # group sublane stride (no +8 halo row block)
    G = -(-N // LP)                       # number of lane groups

    # Groups per grid step: >=2 steps whenever possible (v7x dual TensorCores),
    # several groups per step to amortize the ~0.35us/step overhead.
    NG = max(1, min(8, G // 2)) if G >= 2 else 1
    while NG > 1 and G % NG:
        NG -= 1

    x = jnp.concatenate([amodal, oe], axis=1).astype(jnp.float32)        # (N, 2, H, W)
    x = jnp.pad(x, ((0, G * LP - N), (0, 0), (0, 0), (0, 0)))
    x = x.reshape(G, LP, 2, H, W)
    x = jnp.pad(x, ((0, 0), (0, 0), (0, 0), (0, Hs - H), (0, cs - W)))   # per-sample halo
    x = jnp.transpose(x, (2, 0, 3, 1, 4)).reshape(2, G * Hs, LP * cs)
    x = jnp.pad(x, ((0, 0), (0, 0), (0, Wp - LP * cs)))                  # trailing lanes

    flat = []
    for w, b in params:
        flat += [w.reshape(-1).astype(jnp.float32), b.reshape(-1).astype(jnp.float32)]

    smem = pl.BlockSpec(memory_space=pltpu.MemorySpace.SMEM)
    kernel = functools.partial(_occl_kernel, H=H, W=W, Hs=Hs, Wp=Wp, NG=NG,
                               cs=cs, LP=LP, need_cmask=need_cmask, sgn=_roll_sign())

    step_bytes = 4 * Hs * Wp * (NG * (2 + 1) * 2 + 12)    # dbl-buffered IO + scratch
    vmem_limit = int(min(max(step_bytes + (4 << 20), 16 << 20), 32 << 20))

    out = pl.pallas_call(
        kernel,
        out_shape=jax.ShapeDtypeStruct((G * Hs, Wp), jnp.float32),
        grid=(G // NG,),
        in_specs=[pl.BlockSpec((2, NG * Hs, Wp), lambda i: (0, i, 0))] + [smem] * 8,
        out_specs=pl.BlockSpec((NG * Hs, Wp), lambda i: (i, 0)),
        scratch_shapes=[pltpu.VMEM((12, Hs, Wp), jnp.float32)],
        compiler_params=pltpu.CompilerParams(
            dimension_semantics=("parallel",),            # lane groups are independent
            vmem_limit_bytes=vmem_limit,
        ),
    )(x, *flat)

    # --- unpack: (G*Hs, Wp) -> (N, 1, H, W) --------------------------------------
    out = out.reshape(G, Hs, Wp)[:, :H, :LP * cs]
    out = out.reshape(G, H, LP, cs)[:, :, :, :W]
    out = jnp.transpose(out, (0, 2, 1, 3)).reshape(G * LP, H, W)[:N]
    return out[:, None, :, :]                             # back to NCHW


def init_params(key):
    """Deterministic synthetic parameters (PyTorch Conv2d default-style uniform).

    Weight layout: (tap = kh*3 + kw, Cin, Cout); bias: (Cout,).  A real PyTorch
    state_dict weight (Cout, Cin, 3, 3) maps via transpose(2, 3, 1, 0).reshape(9, Cin, Cout)."""
    params = []
    for cin, cout in _CHANNELS:
        key, k_w, k_b = jax.random.split(key, 3)
        bound = 1.0 / np.sqrt(cin * 9)
        w = jax.random.uniform(k_w, (9, cin, cout), jnp.float32, -bound, bound)
        b = jax.random.uniform(k_b, (cout,), jnp.float32, -bound, bound)
        params.append((w, b))
    return params


def reference_forward(amodal, oe, params):
    """Pure-JAX reference (lax conv) for correctness checking."""
    x = jnp.concatenate([amodal, oe], axis=1)
    x = jnp.transpose(x, (0, 2, 3, 1))                                   # NHWC
    for i, (w, b) in enumerate(params):
        w_hwio = w.reshape(3, 3, w.shape[1], w.shape[2])
        x = lax.conv_general_dilated(
            x, w_hwio, window_strides=(1, 1), padding="SAME",
            dimension_numbers=("NHWC", "HWIO", "NHWC"),
        ) + b.reshape(1, 1, 1, -1)
        if i < 3:
            x = jax.nn.relu(x)
    x = jax.nn.sigmoid(x)
    return jnp.transpose(x, (0, 3, 1, 2))


if __name__ == "__main__":
    key = jax.random.PRNGKey(0)
    key, k_a, k_o = jax.random.split(key, 3)

    N, H, W = 2, 16, 16
    amodal = jax.random.normal(k_a, (N, 1, H, W), jnp.float32)
    oe = jax.random.normal(k_o, (N, 1, H, W), jnp.float32)
    params = init_params(key)

    out = jax.block_until_ready(occlusion_refinement_forward(amodal, oe, params))
    ref = jax.block_until_ready(reference_forward(amodal, oe, params))
    np.testing.assert_allclose(np.asarray(out), np.asarray(ref), atol=1e-5, rtol=1e-5)

    print("KERNEL_OK")
</pallas_src>

<mosaic_0001>
module attributes {stable_mosaic.version = 11 : i64} {
  func.func @k(%arg0: memref<8x128xf32, #tpu.memory_space<vmem>>, %arg1: memref<8x128xf32, #tpu.memory_space<vmem>>) attributes {dimension_semantics = [], scalar_prefetch = 0 : i64, scratch_operands = 0 : i64, tpu.core_type = #tpu.core_type<tc>} {
    %c0 = arith.constant 0 : index
    %c0_0 = arith.constant 0 : index
    %0 = vector.load %arg0[%c0, %c0_0] : memref<8x128xf32, #tpu.memory_space<vmem>>, vector<8x128xf32>
    %c1_i32 = arith.constant 1 : i32
    %1 = tpu.dynamic_rotate %0 by %c1_i32 dim 1 : vector<8x128xf32>, i32 -> vector<8x128xf32>
    %c0_1 = arith.constant 0 : index
    %c0_2 = arith.constant 0 : index
    %2 = vector.load %arg1[%c0_1, %c0_2] : memref<8x128xf32, #tpu.memory_space<vmem>>, vector<8x128xf32>
    tpu.vector_store %arg1[%c0_1, %c0_2], %1 {strides = array<i32>} : memref<8x128xf32, #tpu.memory_space<vmem>>, vector<8x128xf32>,
    return
  }
}

</mosaic_0001>

<llo_original>
// kernel: tpu_custom_call.1
$region0: #{tpu_custom_call.1}
  #allocation0 [shape = 'u32[]', space=smem, size = 0x4, offset = 0x4, fixed_abs, tag = 'smem constant byte address 0x4 - core index']
  #allocation1 [shape = 'u32[144,128]{1,0:T(1,128)}', space=vmem, size = 0x12000, scoped, tag = 'internal scratch']
  %s0 = inlined_call_operand.hbm [shape: f32[8,128], index: 0, kind: input, shape index: {}]
  %s1 = inlined_call_operand.hbm [shape: f32[8,128], index: 1, kind: output, shape index: {}]
  %s2 = sld [smem:[#allocation0]]
  $region18: #{tpu_custom_call.1} parent=0
    _
  %s4 = ssub.s32 1, %s2
  %s5 = scalar_select 0, %s4, %s2
  $region1: #{tpu_custom_call.1} parent=0
    #allocation2 [shape = 'u8[4096]{0}', space=vmem, size = 0x1000, scoped, tag = 'input window, operand 0, single buffered']
    #allocation3 [shape = 's32[1]{0}', space=sflag, size = 0x4, scoped, tag = 'scoped memory for tpu_custom_call.1']
    #allocation4 [shape = 's32[1]{0}', space=sflag, size = 0x4, scoped, tag = 'scoped memory for tpu_custom_call.1']
    #allocation5 [shape = 'u8[4096]{0}', space=vmem, size = 0x1000, scoped, tag = 'output window, operand 0, single buffered']
    %6 = vsyncpa [#allocation3], 0
    %7 = vsyncpa [#allocation4], 0
    // Predicated region
    $region2: #{tpu_custom_call.1} parent=1 // pred_check
      _
    $region3: #{tpu_custom_call.1} parent=1 // pred_check_branch
      %9 = sbr.rel (0) target = $region5
    $region4: #{tpu_custom_call.1} parent=1 // pred_region
      %s11 = ssub.s32 128, 128
      %12 = vsyncadd [#allocation3], %s11
      %s14 = sshll.u32 [#allocation2], 4
      %s15 = int_to_ptr.vmem [resolvable:$true] %s14
      %17 = dma.hbm_to_vmem [thread:$0]  %s0, 128, %s15, [#allocation3]
    $region5: #{tpu_custom_call.1} parent=1 // pred_fallthru
      _
    // Predicated region
    $region6: #{tpu_custom_call.1} parent=1 // pred_check
      _
    $region7: #{tpu_custom_call.1} parent=1 // pred_check_branch
      %19 = sbr.rel (0) target = $region9
    $region8: #{tpu_custom_call.1} parent=1 // pred_region
      %20 = dma.done [#allocation3], 128
    $region9: #{tpu_custom_call.1} parent=1 // pred_fallthru
      _
    %v21 = vld [vmem:[#allocation2] sm:$0xff]
    %22 = vrot.lane.b32.xlu0 %v21, 1
    %v23 = vpop.permute.xlu0 %22
    %24 = vst [vmem:[#allocation5] sm:$0xff] %v23
    // Predicated region
    $region10: #{tpu_custom_call.1} parent=1 // pred_check
      _
    $region11: #{tpu_custom_call.1} parent=1 // pred_check_branch
      %26 = sbr.rel (0) target = $region13
    $region12: #{tpu_custom_call.1} parent=1 // pred_region
      %s28 = ssub.s32 128, 128
      %29 = vsyncadd [#allocation4], %s28
      %s31 = sshll.u32 [#allocation5], 4
      %s32 = int_to_ptr.vmem [resolvable:$true] %s31
      %34 = dma.vmem_to_hbm [thread:$0]  %s32, 128, %s1, [#allocation4]
    $region13: #{tpu_custom_call.1} parent=1 // pred_fallthru
      _
    // Predicated region
    $region14: #{tpu_custom_call.1} parent=1 // pred_check
      _
    $region15: #{tpu_custom_call.1} parent=1 // pred_check_branch
      %36 = sbr.rel (0) target = $region17
    $region16: #{tpu_custom_call.1} parent=1 // pred_region
      %37 = dma.done [#allocation4], 128
    $region17: #{tpu_custom_call.1} parent=1 // pred_fallthru
      _
    %38 = vsyncpa [#allocation3], 1
    %39 = vsyncpa [#allocation4], 1

</llo_original>
